<compile_context>
chip_gen: v7x
topology: tpu7x:2x2x1
jax: 0.10.0
libtpu: 0.0.40
codegen_flags: <defaults>
</compile_context>

<pallas_src>
import jax
import jax.numpy as jnp
from jax.experimental import pallas as pl
from jax.experimental.pallas import tpu as pltpu

LANES = 128
SUBLANES = 8
TILE_ROWS = 8192   # (8192, 128) f32 = 4 MiB per input per pipeline buffer


def _round_up(a, b):
    return ((a + b - 1) // b) * b


def _sublane_rows(dtype):
    # dtype-specific sublane tile: 8 for 4-byte, 16 for bf16, 32 for int8/fp8.
    itemsize = jnp.dtype(dtype).itemsize
    return SUBLANES * max(1, 4 // itemsize)


def _partial_sums(x2d, t2d, tile_rows):
    """Returns a (2, 8, 128) f32 array: slab 0 = inter partials, 1 = total partials."""
    rows = x2d.shape[0]
    num_tiles = pl.cdiv(rows, tile_rows)
    ragged = (rows % tile_rows) != 0

    def kernel(x_ref, t_ref, out_ref):
        i = pl.program_id(0)

        @pl.when(i == 0)
        def _init():
            out_ref[...] = jnp.zeros_like(out_ref)

        xb = x_ref[...].astype(jnp.float32)
        tb = t_ref[...].astype(jnp.float32)

        def accumulate(xv, tv):
            # Pure-VPU tree reduce of the whole tile down to one vreg per
            # quantity, then a single vreg-sized RMW of the resident output.
            inter_v = (xv * tv).reshape(-1, SUBLANES, LANES).sum(axis=0)
            total_v = (xv + tv).reshape(-1, SUBLANES, LANES).sum(axis=0)
            out_ref[0] += inter_v
            out_ref[1] += total_v

        if ragged:
            last = pl.num_programs(0) - 1

            @pl.when(i < last)
            def _fast():
                accumulate(xb, tb)

            @pl.when(i == last)
            def _masked():
                row = jax.lax.broadcasted_iota(jnp.int32, (tile_rows, LANES), 0)
                valid = (i * tile_rows + row) < rows
                accumulate(jnp.where(valid, xb, 0.0), jnp.where(valid, tb, 0.0))
        else:
            accumulate(xb, tb)

    return pl.pallas_call(
        kernel,
        out_shape=jax.ShapeDtypeStruct((2, SUBLANES, LANES), jnp.float32),
        grid_spec=pltpu.PrefetchScalarGridSpec(
            num_scalar_prefetch=0,
            grid=(num_tiles,),
            in_specs=[
                pl.BlockSpec((tile_rows, LANES), lambda i: (i, 0)),
                pl.BlockSpec((tile_rows, LANES), lambda i: (i, 0)),
            ],
            # Constant block index across the reduction axis -> output stays
            # resident in VMEM and is written back to HBM once at the end.
            out_specs=pl.BlockSpec((2, SUBLANES, LANES), lambda i: (0, 0, 0)),
        ),
        compiler_params=pltpu.CompilerParams(
            dimension_semantics=("arbitrary",),
            vmem_limit_bytes=40 * 1024 * 1024,
        ),
    )(x2d, t2d)


def iou_loss(inputs, targets, smooth=1.0):
    """Pallas equivalent of IoULoss.forward. Returns a scalar float32."""
    x = jnp.reshape(inputs, (-1,))
    t = jnp.reshape(targets, (-1,))
    # Keep native dtype (bf16 stays bf16 -> half the HBM traffic); only promote
    # bools, which have no clean sub-byte block layout.
    if x.dtype == jnp.bool_:
        x = x.astype(jnp.float32)
    if t.dtype == jnp.bool_:
        t = t.astype(jnp.float32)

    n = x.shape[0]
    rows = n // LANES
    tail = n - rows * LANES

    inter = jnp.float32(0.0)
    total = jnp.float32(0.0)

    if tail:
        # < 128-element ragged tail handled in plain JAX (negligible work);
        # no full-array pad/copy is ever materialized.
        xt = x[rows * LANES:].astype(jnp.float32)
        tt = t[rows * LANES:].astype(jnp.float32)
        inter = inter + jnp.sum(xt * tt)
        total = total + jnp.sum(xt + tt)

    if rows > 0:
        x2d = (x[: rows * LANES] if tail else x).reshape(rows, LANES)
        t2d = (t[: rows * LANES] if tail else t).reshape(rows, LANES)
        sub = max(_sublane_rows(x2d.dtype), _sublane_rows(t2d.dtype))
        tile_rows = min(TILE_ROWS, _round_up(rows, sub))
        parts = _partial_sums(x2d, t2d, tile_rows)
        inter = inter + jnp.sum(parts[0])
        total = total + jnp.sum(parts[1])

    union = total - inter
    iou = (inter + smooth) / (union + smooth)
    return (1.0 - iou).astype(jnp.float32)


if __name__ == "__main__":
    key = jax.random.PRNGKey(0)
    k1, k2 = jax.random.split(key)

    # Segmentation-style shapes: (N, C, H, W)
    inputs = jax.nn.sigmoid(jax.random.normal(k1, (2, 4, 16, 16), dtype=jnp.float32))
    targets = (jax.random.uniform(k2, (2, 4, 16, 16)) > 0.5).astype(jnp.float32)

    loss = iou_loss(inputs, targets, smooth=1.0)
    loss = jax.block_until_ready(loss)

    # Plain-JAX reference (matches the PyTorch IoULoss forward).
    xi = inputs.reshape(-1).astype(jnp.float32)
    ti = targets.reshape(-1).astype(jnp.float32)
    inter = jnp.sum(xi * ti)
    total = jnp.sum(xi + ti)
    union = total - inter
    ref = 1.0 - (inter + 1.0) / (union + 1.0)
    assert jnp.allclose(loss, ref, atol=1e-5, rtol=1e-5), (loss, ref)

    print("KERNEL_OK")
</pallas_src>

<mosaic_0001>
module attributes {stable_mosaic.version = 11 : i64} {
  func.func @kernel(%arg0: i32, %arg1: memref<16x128xf32, #tpu.memory_space<vmem>>, %arg2: memref<16x128xf32, #tpu.memory_space<vmem>>, %arg3: memref<2x8x128xf32, #tpu.memory_space<vmem>>) attributes {dimension_semantics = [#tpu.dimension_semantics<arbitrary>], iteration_bounds = array<i64: 1>, scalar_prefetch = 0 : i64, scratch_operands = 0 : i64, tpu.core_type = #tpu.core_type<tc>, window_params = [{transform_indices = @transform_0, window_bounds = array<i64: 16, 128>}, {transform_indices = @transform_1, window_bounds = array<i64: 16, 128>}, {pipeline_mode = #tpu.pipeline_mode<synchronous>, transform_indices = @transform_2, window_bounds = array<i64: 2, 8, 128>}]} {
    %c0_i32 = arith.constant 0 : i32
    %0 = arith.cmpi eq, %arg0, %c0_i32 : i32
    %1 = arith.extui %0 : i1 to i32
    %c0_i32_0 = arith.constant 0 : i32
    %2 = arith.cmpi ne, %1, %c0_i32_0 : i32
    scf.if %2 {
      %cst_16 = arith.constant 0.000000e+00 : f32
      %23 = vector.broadcast %cst_16 : f32 to vector<2x8x128xf32>
      %c0_17 = arith.constant 0 : index
      %c0_18 = arith.constant 0 : index
      %c0_19 = arith.constant 0 : index
      %24 = vector.load %arg3[%c0_17, %c0_18, %c0_19] : memref<2x8x128xf32, #tpu.memory_space<vmem>>, vector<2x8x128xf32>
      tpu.vector_store %arg3[%c0_17, %c0_18, %c0_19], %23 {strides = array<i32>} : memref<2x8x128xf32, #tpu.memory_space<vmem>>, vector<2x8x128xf32>,
    } else {
    }
    %c0 = arith.constant 0 : index
    %c0_1 = arith.constant 0 : index
    %3 = vector.load %arg1[%c0, %c0_1] : memref<16x128xf32, #tpu.memory_space<vmem>>, vector<16x128xf32>
    %c0_2 = arith.constant 0 : index
    %c0_3 = arith.constant 0 : index
    %4 = vector.load %arg2[%c0_2, %c0_3] : memref<16x128xf32, #tpu.memory_space<vmem>>, vector<16x128xf32>
    %5 = arith.mulf %3, %4 : vector<16x128xf32>
    %6 = vector.shape_cast %5 : vector<16x128xf32> to vector<2x8x128xf32>
    %cst = arith.constant dense<0.000000e+00> : vector<8x128xf32>
    %7 = vector.multi_reduction <add>, %6, %cst [0] : vector<2x8x128xf32> to vector<8x128xf32>
    %8 = arith.addf %3, %4 : vector<16x128xf32>
    %9 = vector.shape_cast %8 : vector<16x128xf32> to vector<2x8x128xf32>
    %cst_4 = arith.constant dense<0.000000e+00> : vector<8x128xf32>
    %10 = vector.multi_reduction <add>, %9, %cst_4 [0] : vector<2x8x128xf32> to vector<8x128xf32>
    %c0_5 = arith.constant 0 : index
    %c0_6 = arith.constant 0 : index
    %c0_7 = arith.constant 0 : index
    %11 = vector.load %arg3[%c0_5, %c0_6, %c0_7] : memref<2x8x128xf32, #tpu.memory_space<vmem>>, vector<1x8x128xf32>
    %12 = vector.shape_cast %11 : vector<1x8x128xf32> to vector<8x128xf32>
    %13 = arith.addf %12, %7 : vector<8x128xf32>
    %c0_8 = arith.constant 0 : index
    %c0_9 = arith.constant 0 : index
    %c0_10 = arith.constant 0 : index
    %14 = vector.load %arg3[%c0_8, %c0_9, %c0_10] : memref<2x8x128xf32, #tpu.memory_space<vmem>>, vector<1x8x128xf32>
    %15 = vector.shape_cast %14 : vector<1x8x128xf32> to vector<8x128xf32>
    %16 = vector.shape_cast %13 : vector<8x128xf32> to vector<1x8x128xf32>
    tpu.vector_store %arg3[%c0_8, %c0_9, %c0_10], %16 {strides = array<i32>} : memref<2x8x128xf32, #tpu.memory_space<vmem>>, vector<1x8x128xf32>,
    %c1 = arith.constant 1 : index
    %c0_11 = arith.constant 0 : index
    %c0_12 = arith.constant 0 : index
    %17 = vector.load %arg3[%c1, %c0_11, %c0_12] : memref<2x8x128xf32, #tpu.memory_space<vmem>>, vector<1x8x128xf32>
    %18 = vector.shape_cast %17 : vector<1x8x128xf32> to vector<8x128xf32>
    %19 = arith.addf %18, %10 : vector<8x128xf32>
    %c1_13 = arith.constant 1 : index
    %c0_14 = arith.constant 0 : index
    %c0_15 = arith.constant 0 : index
    %20 = vector.load %arg3[%c1_13, %c0_14, %c0_15] : memref<2x8x128xf32, #tpu.memory_space<vmem>>, vector<1x8x128xf32>
    %21 = vector.shape_cast %20 : vector<1x8x128xf32> to vector<8x128xf32>
    %22 = vector.shape_cast %19 : vector<8x128xf32> to vector<1x8x128xf32>
    tpu.vector_store %arg3[%c1_13, %c0_14, %c0_15], %22 {strides = array<i32>} : memref<2x8x128xf32, #tpu.memory_space<vmem>>, vector<1x8x128xf32>,
    return
  }
  func.func @transform_0(%arg0: i32) -> (i32, i32) {
    %c0_i32 = arith.constant 0 : i32
    %c0_i32_0 = arith.constant 0 : i32
    return %arg0, %c0_i32 : i32, i32
  }
  func.func @transform_1(%arg0: i32) -> (i32, i32) {
    %c0_i32 = arith.constant 0 : i32
    %c0_i32_0 = arith.constant 0 : i32
    return %arg0, %c0_i32 : i32, i32
  }
  func.func @transform_2(%arg0: i32) -> (i32, i32, i32) {
    %c0_i32 = arith.constant 0 : i32
    %c0_i32_0 = arith.constant 0 : i32
    %c0_i32_1 = arith.constant 0 : i32
    %c0_i32_2 = arith.constant 0 : i32
    return %c0_i32, %c0_i32_0, %c0_i32_1 : i32, i32, i32
  }
}

</mosaic_0001>

<llo_original>
// kernel: tpu_custom_call.1
$region0: #{tpu_custom_call.1}
  #allocation0 [shape = 'u32[]', space=smem, size = 0x4, offset = 0x4, fixed_abs, tag = 'smem constant byte address 0x4 - core index']
  #allocation1 [shape = 'u32[144,128]{1,0:T(1,128)}', space=vmem, size = 0x12000, scoped, tag = 'internal scratch']
  %s0 = inlined_call_operand.hbm [shape: f32[16,128], index: 0, kind: input, shape index: {}]
  %s1 = inlined_call_operand.hbm [shape: f32[16,128], index: 1, kind: input, shape index: {}]
  %s2 = inlined_call_operand.hbm [shape: f32[2,8,128], index: 2, kind: output, shape index: {}]
  %s3 = sld [smem:[#allocation0]]
  $region30: #{tpu_custom_call.1} parent=0
    _
  %s5 = ssub.s32 1, %s3
  %s6 = scalar_select 0, %s5, %s3
  $region1: #{tpu_custom_call.1} parent=0
    #allocation2 [shape = 'u8[8192]{0}', space=vmem, size = 0x2000, scoped, tag = 'input window, operand 0, single buffered']
    #allocation3 [shape = 's32[1]{0}', space=sflag, size = 0x4, scoped, tag = 'scoped memory for tpu_custom_call.1']
    #allocation4 [shape = 's32[1]{0}', space=sflag, size = 0x4, scoped, tag = 'scoped memory for tpu_custom_call.1']
    #allocation5 [shape = 'u8[8192]{0}', space=vmem, size = 0x2000, scoped, tag = 'input window, operand 1, single buffered']
    #allocation6 [shape = 's32[1]{0}', space=sflag, size = 0x4, scoped, tag = 'scoped memory for tpu_custom_call.1']
    #allocation7 [shape = 'u8[8192]{0}', space=vmem, size = 0x2000, scoped, tag = 'output window, operand 0, single buffered']
    %7 = vsyncpa [#allocation3], 0
    %8 = vsyncpa [#allocation6], 0
    %9 = vsyncpa [#allocation4], 0
    // Predicated region
    $region2: #{tpu_custom_call.1} parent=1 // pred_check
      _
    $region3: #{tpu_custom_call.1} parent=1 // pred_check_branch
      %11 = sbr.rel (0) target = $region5
    $region4: #{tpu_custom_call.1} parent=1 // pred_region
      %s13 = ssub.s32 256, 256
      %14 = vsyncadd [#allocation3], %s13
      %s15 = sshll.u32 [#allocation2], 4
      %s16 = int_to_ptr.vmem [resolvable:$true] %s15
      %21 = dma.hbm_to_vmem [thread:$0]  %s0, 256, %s16, [#allocation3], 128, 128, 8
    $region5: #{tpu_custom_call.1} parent=1 // pred_fallthru
      _
    // Predicated region
    $region6: #{tpu_custom_call.1} parent=1 // pred_check
      _
    $region7: #{tpu_custom_call.1} parent=1 // pred_check_branch
      %23 = sbr.rel (0) target = $region9
    $region8: #{tpu_custom_call.1} parent=1 // pred_region
      %s25 = ssub.s32 256, 256
      %26 = vsyncadd [#allocation6], %s25
      %s27 = sshll.u32 [#allocation5], 4
      %s28 = int_to_ptr.vmem [resolvable:$true] %s27
      %33 = dma.hbm_to_vmem [thread:$0]  %s1, 256, %s28, [#allocation6], 128, 128, 8
    $region9: #{tpu_custom_call.1} parent=1 // pred_fallthru
      _
    // Predicated region
    $region10: #{tpu_custom_call.1} parent=1 // pred_check
      _
    $region11: #{tpu_custom_call.1} parent=1 // pred_check_branch
      %35 = sbr.rel (0) target = $region13
    $region12: #{tpu_custom_call.1} parent=1 // pred_region
      %36 = dma.done [#allocation3], 256
    $region13: #{tpu_custom_call.1} parent=1 // pred_fallthru
      _
    // Predicated region
    $region14: #{tpu_custom_call.1} parent=1 // pred_check
      _
    $region15: #{tpu_custom_call.1} parent=1 // pred_check_branch
      %38 = sbr.rel (0) target = $region17
    $region16: #{tpu_custom_call.1} parent=1 // pred_region
      %39 = dma.done [#allocation6], 256
    $region17: #{tpu_custom_call.1} parent=1 // pred_fallthru
      _
    %p40 = scmp.eq.s32.totalorder 0, 0
    // Predicated region
    $region18: #{tpu_custom_call.1} parent=1 // pred_check
      %p41 = pneg %p40
    $region19: #{tpu_custom_call.1} parent=1 // pred_check_branch
      %43 = sbr.rel (%p41) target = $region21
    $region20: #{tpu_custom_call.1} parent=1 // pred_region
      %44 = vst [vmem:[#allocation7] sm:$0xff] 0.0
      %45 = vst [vmem:[#allocation7 + $0x8] sm:$0xff] 0.0
    $region21: #{tpu_custom_call.1} parent=1 // pred_fallthru
      _
    %v46 = vld [vmem:[#allocation2] sm:$0xff]
    %v47 = vld [vmem:[#allocation2 + $0x8] sm:$0xff]
    %v48 = vld [vmem:[#allocation5] sm:$0xff]
    %v49 = vld [vmem:[#allocation5 + $0x8] sm:$0xff]
    %v50 = vmul.f32 %v46, %v48
    %v51 = vmul.f32 %v47, %v49
    %v52 = vadd.f32 %v50, %v51
    %v53 = vadd.f32 %v46, %v48
    %v54 = vadd.f32 %v47, %v49
    %v55 = vadd.f32 %v53, %v54
    %v56 = vld [vmem:[#allocation7] sm:$0xff]
    %v57 = vadd.f32 %v56, %v52
    %58 = vst [vmem:[#allocation7] sm:$0xff] %v57
    %s59 = scalar_lea.vmem [#allocation7], 8
    %v60 = vld [vmem:[%s59] sm:$0xff]
    %v61 = vadd.f32 %v60, %v55
    %62 = vst [vmem:[%s59] sm:$0xff] %v61
    // Predicated region
    $region22: #{tpu_custom_call.1} parent=1 // pred_check
      _
    $region23: #{tpu_custom_call.1} parent=1 // pred_check_branch
      %64 = sbr.rel (0) target = $region25
    $region24: #{tpu_custom_call.1} parent=1 // pred_region
      %s66 = ssub.s32 256, 256
      %67 = vsyncadd [#allocation4], %s66
      %s68 = sshll.u32 [#allocation7], 4
      %s69 = int_to_ptr.vmem [resolvable:$true] %s68
      %74 = dma.vmem_to_hbm [thread:$0]  %s69, 256, %s2, [#allocation4], 128, 128, 8
    $region25: #{tpu_custom_call.1} parent=1 // pred_fallthru
      _
    // Predicated region
    $region26: #{tpu_custom_call.1} parent=1 // pred_check
      _
    $region27: #{tpu_custom_call.1} parent=1 // pred_check_branch
      %76 = sbr.rel (0) target = $region29
    $region28: #{tpu_custom_call.1} parent=1 // pred_region
      %77 = dma.done [#allocation4], 256
    $region29: #{tpu_custom_call.1} parent=1 // pred_fallthru
      _
    %78 = vsyncpa [#allocation3], 1
    %79 = vsyncpa [#allocation6], 1
    %80 = vsyncpa [#allocation4], 1

</llo_original>
